<compile_context>
chip_gen: v5e
topology: v5e:2x2
jax: 0.10.0
libtpu: 0.0.40
codegen_flags: <defaults>
</compile_context>

<pallas_src>
import math

import jax
import jax.numpy as jnp
from jax.experimental import pallas as pl
from jax.experimental.pallas import tpu as pltpu


def make_encoding(position: jnp.ndarray, d_model: int) -> jnp.ndarray:
    """Equivalent of TimeFrequencyEncoding.make_encoding -> shape (1, len(position), d_model)."""
    position = position.astype(jnp.float32)[:, None]                      # (P, 1)
    div_term = jnp.exp(
        jnp.arange(0, d_model, 2, dtype=jnp.float32) * (-math.log(10000.0) / d_model)
    )                                                                     # (d_model//2,)
    angles = position * div_term                                          # (P, d_model//2)
    pe = jnp.zeros((position.shape[0], d_model), dtype=jnp.float32)
    pe = pe.at[:, 0::2].set(jnp.sin(angles))
    pe = pe.at[:, 1::2].set(jnp.cos(angles))
    return pe[None]                                                       # (1, P, d_model)


def _add_pe_kernel(x_ref, pe_ref, o_ref):
    # Elementwise add in f32 (accurate even for bf16 activations), cast on store.
    # Works for both the 2-D lane-dense path (x (tb, tf) + pe (1, tf)) and the 3-D
    # fallback (x (tb, ts, D) + pe (ts, D)) via jnp broadcasting.
    o_ref[...] = (x_ref[...].astype(jnp.float32)
                  + pe_ref[...].astype(jnp.float32)).astype(o_ref.dtype)


# ~2 MiB per x/out block; double-buffered 2*(x + out + pe) stays under the v5e 16 MiB
# default scoped-VMEM limit (and far under v6e/v7x's 32 MiB), so no vmem override needed.
_X_BLOCK_BUDGET = 2 << 20


def _largest_divisor_leq(n: int, limit: int) -> int:
    """Largest divisor of n that is <= limit (>= 1)."""
    best = 1
    d = 1
    while d * d <= n:
        if n % d == 0:
            for c in (d, n // d):
                if best < c <= limit:
                    best = c
        d += 1
    return best


def _choose_batch_tile(B: int, row_bytes: int) -> int:
    """Rows per block: full B, a multiple-of-8 divisor of B, or a multiple of 8 within budget."""
    rows_budget = max(1, _X_BLOCK_BUDGET // max(row_bytes, 1))
    if B <= rows_budget:
        return B                                            # full-dim block: always legal
    cands = [m for m in range(8, B + 1, 8) if B % m == 0 and m <= rows_budget]
    if cands:
        return max(cands)
    return max(8, (rows_budget // 8) * 8)                   # non-divisor; last block masked


def _choose_step_tile(S: int, row_bytes: int) -> int:
    """(3-D fallback) steps per block: full S, a multiple-of-8 divisor, or a multiple of 8."""
    rows_budget = max(8, (1 << 20) // max(row_bytes, 1))
    if S <= rows_budget:
        return S
    cands = [m for m in range(8, S + 1, 8) if S % m == 0 and m <= rows_budget]
    if cands:
        return max(cands)
    return max(8, (rows_budget // 8) * 8)


class TimeFrequencyEncoding:
    """JAX/Pallas port of the PyTorch TimeFrequencyEncoding module (dropout p=0 -> identity)."""

    def __init__(self, d_model: int, max_steps: int, n_freq_patches: int,
                 dropout: float = 0.0, time_freq_pos_offset: int = 1):
        if d_model % 2 != 0:
            raise ValueError("d_model must be even (same implicit constraint as the PyTorch module)")
        time_pos = jnp.arange(max_steps) // n_freq_patches
        offset = time_pos[-1] + time_freq_pos_offset
        freq_pos = jnp.arange(max_steps) % n_freq_patches + offset
        self.last_pos = jnp.max(freq_pos)
        self.te = make_encoding(time_pos, d_model)           # (1, max_steps, d_model) f32
        self.fe = make_encoding(freq_pos, d_model)           # (1, max_steps, d_model) f32
        # Fused table: one DMA stream + one add in the kernel instead of two.
        # (Summation order differs from PyTorch's (x+te)+fe by <= 1 ulp in f32.)
        self.pe = (self.te + self.fe)[0]                      # (max_steps, d_model) f32
        self.d_model = d_model
        self.max_steps = max_steps

    def __call__(self, x: jnp.ndarray, *, donate_x: bool = False) -> jnp.ndarray:
        B, S, D = x.shape
        if S > self.max_steps:
            raise ValueError(f"sequence length {S} exceeds max_steps {self.max_steps}")

        pe = self.pe[:S]                                      # (S, D) f32, cheap static slice
        x_item = jnp.dtype(x.dtype).itemsize
        if x_item < 4:
            # bf16/fp16 activations: read the encoding table at the same width to halve
            # its HBM traffic; the add still runs in f32 inside the kernel.
            pe = pe.astype(x.dtype)
        pe_item = jnp.dtype(pe.dtype).itemsize

        cost = pl.CostEstimate(
            flops=B * S * D,
            transcendentals=0,
            bytes_accessed=2 * B * S * D * x_item + S * D * pe_item,
        )
        io_alias = {0: 0} if donate_x else {}
        cparams = pltpu.CompilerParams(dimension_semantics=("parallel", "parallel"))

        F = S * D
        # Lane-dense path whenever S*D is a multiple of 128, or small enough to be one block.
        lane_dense = (F % 128 == 0) or (F * max(x_item, pe_item) <= _X_BLOCK_BUDGET)

        if lane_dense:
            if F % 128 == 0:
                # Largest multiple-of-128 divisor of F that fits the per-block budget
                # (assuming up to 8 batch rows per block).
                max_f_elems = max(128, _X_BLOCK_BUDGET // (8 * x_item))
                tile_f = 128 * _largest_divisor_leq(F // 128, max(1, max_f_elems // 128))
            else:
                tile_f = F                                    # full-dim block: always legal
            tile_b = _choose_batch_tile(B, tile_f * x_item)
            grid = (pl.cdiv(F, tile_f), pl.cdiv(B, tile_b))   # batch innermost -> pe block resident

            out = pl.pallas_call(
                _add_pe_kernel,
                out_shape=jax.ShapeDtypeStruct((B, F), x.dtype),
                grid=grid,
                in_specs=[
                    pl.BlockSpec((tile_b, tile_f), lambda f, b: (b, f)),
                    pl.BlockSpec((1, tile_f), lambda f, b: (0, f)),
                ],
                out_specs=pl.BlockSpec((tile_b, tile_f), lambda f, b: (b, f)),
                cost_estimate=cost,
                compiler_params=cparams,
                input_output_aliases=io_alias,
            )(x.reshape(B, F), pe.reshape(1, F))
            return out.reshape(B, S, D)

        # Fallback for layouts where S*D is not a multiple of 128 and too large for a
        # single flat block: tile over (batch, steps) keeping D whole.
        # TODO(synk): stores here are masked when D % 128 != 0; the lane-dense path
        #             above covers the common configurations.
        tile_s = _choose_step_tile(S, D * x_item)
        tile_b = _choose_batch_tile(B, tile_s * D * x_item)
        grid = (pl.cdiv(S, tile_s), pl.cdiv(B, tile_b))

        out = pl.pallas_call(
            _add_pe_kernel,
            out_shape=jax.ShapeDtypeStruct((B, S, D), x.dtype),
            grid=grid,
            in_specs=[
                pl.BlockSpec((tile_b, tile_s, D), lambda s, b: (b, s, 0)),
                pl.BlockSpec((tile_s, D), lambda s, b: (s, 0)),
            ],
            out_specs=pl.BlockSpec((tile_b, tile_s, D), lambda s, b: (b, s, 0)),
            cost_estimate=cost,
            compiler_params=cparams,
            input_output_aliases=io_alias,
        )(x, pe)
        return out


if __name__ == "__main__":
    d_model = 32
    max_steps = 16
    n_freq_patches = 4
    batch = 2
    seq = 8  # <= max_steps

    key = jax.random.PRNGKey(0)
    x = jax.random.normal(key, (batch, seq, d_model), dtype=jnp.float32)

    module = TimeFrequencyEncoding(d_model, max_steps, n_freq_patches, dropout=0.0)
    y = jax.block_until_ready(module(x))

    # Reference check in plain JAX (same math as the PyTorch forward).
    ref = x + module.te[0, :seq] + module.fe[0, :seq]
    assert y.shape == ref.shape, "shape mismatch vs reference"
    assert jnp.allclose(y, ref, atol=1e-5), "mismatch vs reference"

    print("KERNEL_OK")
</pallas_src>

<mosaic_0001>
module attributes {stable_mosaic.version = 11 : i64} {
  func.func @_add_pe_kernel(%arg0: i32, %arg1: i32, %arg2: memref<2x256xf32, #tpu.memory_space<vmem>>, %arg3: memref<1x256xf32, #tpu.memory_space<vmem>>, %arg4: memref<2x256xf32, #tpu.memory_space<vmem>>) attributes {dimension_semantics = [#tpu.dimension_semantics<parallel>, #tpu.dimension_semantics<parallel>], iteration_bounds = array<i64: 1, 1>, scalar_prefetch = 0 : i64, scratch_operands = 0 : i64, tpu.core_type = #tpu.core_type<tc>, window_params = [{transform_indices = @transform_0, window_bounds = array<i64: 2, 256>}, {transform_indices = @transform_1, window_bounds = array<i64: 1, 256>}, {transform_indices = @transform_2, window_bounds = array<i64: 2, 256>}]} {
    %c0 = arith.constant 0 : index
    %c0_0 = arith.constant 0 : index
    %0 = vector.load %arg2[%c0, %c0_0] : memref<2x256xf32, #tpu.memory_space<vmem>>, vector<2x256xf32>
    %c0_1 = arith.constant 0 : index
    %c0_2 = arith.constant 0 : index
    %1 = vector.load %arg3[%c0_1, %c0_2] : memref<1x256xf32, #tpu.memory_space<vmem>>, vector<1x256xf32>
    %2 = vector.broadcast %1 : vector<1x256xf32> to vector<2x256xf32>
    %3 = arith.addf %0, %2 : vector<2x256xf32>
    %c0_3 = arith.constant 0 : index
    %c0_4 = arith.constant 0 : index
    %4 = vector.load %arg4[%c0_3, %c0_4] : memref<2x256xf32, #tpu.memory_space<vmem>>, vector<2x256xf32>
    tpu.vector_store %arg4[%c0_3, %c0_4], %3 {strides = array<i32>} : memref<2x256xf32, #tpu.memory_space<vmem>>, vector<2x256xf32>,
    return
  }
  func.func @transform_0(%arg0: i32, %arg1: i32) -> (i32, i32) {
    %c0_i32 = arith.constant 0 : i32
    return %arg1, %arg0 : i32, i32
  }
  func.func @transform_1(%arg0: i32, %arg1: i32) -> (i32, i32) {
    %c0_i32 = arith.constant 0 : i32
    %c0_i32_0 = arith.constant 0 : i32
    return %c0_i32, %arg0 : i32, i32
  }
  func.func @transform_2(%arg0: i32, %arg1: i32) -> (i32, i32) {
    %c0_i32 = arith.constant 0 : i32
    return %arg1, %arg0 : i32, i32
  }
}

</mosaic_0001>

<llo_original>
// kernel: tpu_custom_call.1
$region0: #{tpu_custom_call.1}
  #allocation0 [shape = 'u32[]', space=smem, size = 0x4, offset = 0x4, fixed_abs, tag = 'smem constant byte address 0x4 - core index']
  #allocation1 [shape = 'u32[72,128]{1,0:T(1,128)}', space=vmem, size = 0x9000, scoped, tag = 'internal scratch']
  %s0 = inlined_call_operand.hbm [shape: f32[2,256], index: 0, kind: input, shape index: {}]
  %s1 = inlined_call_operand.hbm [shape: f32[1,256], index: 1, kind: input, shape index: {}]
  %s2 = inlined_call_operand.hbm [shape: f32[2,256], index: 2, kind: output, shape index: {}]
  %s3 = sld [smem:[#allocation0]]
  $region26: #{tpu_custom_call.1} parent=0
    _
  %s5 = ssub.s32 1, %s3
  %s6 = scalar_select 0, %s5, %s3
  $region1: #{tpu_custom_call.1} parent=0
    #allocation2 [shape = 'u8[2048]{0}', space=vmem, size = 0x800, scoped, tag = 'input window, operand 0, single buffered']
    #allocation3 [shape = 's32[1]{0}', space=sflag, size = 0x4, scoped, tag = 'scoped memory for tpu_custom_call.1']
    #allocation4 [shape = 's32[1]{0}', space=sflag, size = 0x4, scoped, tag = 'scoped memory for tpu_custom_call.1']
    #allocation5 [shape = 'u8[1024]{0}', space=vmem, size = 0x400, scoped, tag = 'input window, operand 1, single buffered']
    #allocation6 [shape = 's32[1]{0}', space=sflag, size = 0x4, scoped, tag = 'scoped memory for tpu_custom_call.1']
    #allocation7 [shape = 'u8[2048]{0}', space=vmem, size = 0x800, scoped, tag = 'output window, operand 0, single buffered']
    %7 = vsyncpa [#allocation3], 0
    %8 = vsyncpa [#allocation6], 0
    %9 = vsyncpa [#allocation4], 0
    // Predicated region
    $region2: #{tpu_custom_call.1} parent=1 // pred_check
      _
    $region3: #{tpu_custom_call.1} parent=1 // pred_check_branch
      %11 = sbr.rel (0) target = $region5
    $region4: #{tpu_custom_call.1} parent=1 // pred_region
      %13 = vsyncadd [#allocation3], 0
      %s15 = sshll.u32 %s0, 4
      %s16 = int_to_ptr.hbm [resolvable:$true] %s15
      %s17 = sshll.u32 [#allocation2], 4
      %s18 = int_to_ptr.vmem [resolvable:$true] %s17
      %20 = dma.hbm_to_vmem [thread:$0]  %s16, 64, %s18, [#allocation3]
    $region5: #{tpu_custom_call.1} parent=1 // pred_fallthru
      _
    // Predicated region
    $region6: #{tpu_custom_call.1} parent=1 // pred_check
      _
    $region7: #{tpu_custom_call.1} parent=1 // pred_check_branch
      %22 = sbr.rel (0) target = $region9
    $region8: #{tpu_custom_call.1} parent=1 // pred_region
      %24 = vsyncadd [#allocation6], 0
      %s26 = sshll.u32 %s1, 4
      %s27 = int_to_ptr.hbm [resolvable:$true] %s26
      %s28 = sshll.u32 [#allocation5], 4
      %s29 = int_to_ptr.vmem [resolvable:$true] %s28
      %31 = dma.hbm_to_vmem [thread:$0]  %s27, 32, %s29, [#allocation6]
    $region9: #{tpu_custom_call.1} parent=1 // pred_fallthru
      _
    // Predicated region
    $region10: #{tpu_custom_call.1} parent=1 // pred_check
      _
    $region11: #{tpu_custom_call.1} parent=1 // pred_check_branch
      %33 = sbr.rel (0) target = $region13
    $region12: #{tpu_custom_call.1} parent=1 // pred_region
      %35 = dma.done [#allocation3], 64
    $region13: #{tpu_custom_call.1} parent=1 // pred_fallthru
      _
    // Predicated region
    $region14: #{tpu_custom_call.1} parent=1 // pred_check
      _
    $region15: #{tpu_custom_call.1} parent=1 // pred_check_branch
      %37 = sbr.rel (0) target = $region17
    $region16: #{tpu_custom_call.1} parent=1 // pred_region
      %39 = dma.done [#allocation6], 32
    $region17: #{tpu_custom_call.1} parent=1 // pred_fallthru
      _
    %v40 = vld [vmem:[#allocation2] sm:$0xf]
    %v41 = vld [vmem:[#allocation5] sm:$0x3]
    %v43 = vperm.slane %v41, 0
    %v44 = vperm.slane %v41, 1
    %v45 = vrot.slane %v44, 6
    %vm46 = vcmask 1041408
    %v47 = vsel %vm46, %v43, %v45
    %v49 = vadd.f32 %v40, %v47
    %50 = vst [vmem:[#allocation7] sm:$0xf] %v49
    // Predicated region
    $region18: #{tpu_custom_call.1} parent=1 // pred_check
      _
    $region19: #{tpu_custom_call.1} parent=1 // pred_check_branch
      %52 = sbr.rel (0) target = $region21
    $region20: #{tpu_custom_call.1} parent=1 // pred_region
      %54 = vsyncadd [#allocation4], 0
      %s56 = sshll.u32 [#allocation7], 4
      %s57 = int_to_ptr.vmem [resolvable:$true] %s56
      %s58 = sshll.u32 %s2, 4
      %s59 = int_to_ptr.hbm [resolvable:$true] %s58
      %61 = dma.vmem_to_hbm [thread:$0]  %s57, 64, %s59, [#allocation4]
    $region21: #{tpu_custom_call.1} parent=1 // pred_fallthru
      _
    // Predicated region
    $region22: #{tpu_custom_call.1} parent=1 // pred_check
      _
    $region23: #{tpu_custom_call.1} parent=1 // pred_check_branch
      %63 = sbr.rel (0) target = $region25
    $region24: #{tpu_custom_call.1} parent=1 // pred_region
      %65 = dma.done [#allocation4], 64
    $region25: #{tpu_custom_call.1} parent=1 // pred_fallthru
      _
    %66 = vsyncpa [#allocation3], 1
    %67 = vsyncpa [#allocation6], 1
    %68 = vsyncpa [#allocation4], 1

</llo_original>
